<compile_context>
chip_gen: v5e
topology: v5e:2x2
jax: 0.10.0
libtpu: 0.0.40
codegen_flags: <defaults>
</compile_context>

<pallas_src>
import functools
import numpy as np
import jax
import jax.numpy as jnp
from jax import lax
from jax.experimental import pallas as pl
from jax.experimental.pallas import tpu as pltpu

KS = 4                 # conv kernel size
STR = 4                # conv stride  (== KS -> exact patchify / depth-to-space)
PAD = 6                # conv padding
OUT_CHANNELS1 = 32
OUT_CHANNELS2 = 64
OUT_FC_FEATURES = 256
NEG_SLOPE = 0.2        # LeakyReLU slope


# ----------------------------- in-kernel activations (f32) -----------------------------

def _leaky_relu(y):
    return jnp.where(y >= 0.0, y, NEG_SLOPE * y)


def _elu(y):
    # exp runs on the EUP; min() keeps the dead branch finite.
    return jnp.where(y > 0.0, y, jnp.exp(jnp.minimum(y, 0.0)) - 1.0)


def _sigmoid(y):
    # tanh form -> EUP slot, no VPU divide.
    return 0.5 * jnp.tanh(0.5 * y) + 0.5


_ACTS = {"none": lambda y: y, "leaky": _leaky_relu, "elu": _elu, "sigmoid": _sigmoid}


# ----------------------------- generic fused linear + activation -----------------------------

def _linear_act_kernel(x_ref, w_ref, b_ref, o_ref, *, act):
    y = jnp.dot(x_ref[...], w_ref[...], preferred_element_type=jnp.float32)
    y = y + b_ref[...]
    o_ref[...] = _ACTS[act](y)


def _round_up(v, m):
    return (v + m - 1) // m * m


def linear_act(x, w, b, act, *, tile_m=512):
    """act(x @ w + b); row-tiled grid ("parallel"), weights/bias VMEM-resident."""
    M, K = x.shape
    N = w.shape[1]
    Mp = _round_up(max(M, 8), 8)
    if Mp > tile_m:
        Mp = _round_up(M, tile_m)
        tm = tile_m
    else:
        tm = Mp
    if Mp != M:
        x = jnp.zeros((Mp, K), jnp.float32).at[:M].set(x)
    b2 = jnp.reshape(b, (1, N)).astype(jnp.float32)

    out = pl.pallas_call(
        functools.partial(_linear_act_kernel, act=act),
        out_shape=jax.ShapeDtypeStruct((Mp, N), jnp.float32),
        grid_spec=pltpu.PrefetchScalarGridSpec(
            num_scalar_prefetch=0,
            grid=(Mp // tm,),
            in_specs=[
                pl.BlockSpec((tm, K), lambda i: (i, 0)),   # row tile of activations
                pl.BlockSpec((K, N), lambda i: (0, 0)),    # resident weights
                pl.BlockSpec((1, N), lambda i: (0, 0)),    # resident bias
            ],
            out_specs=pl.BlockSpec((tm, N), lambda i: (i, 0)),
        ),
        compiler_params=pltpu.CompilerParams(dimension_semantics=("parallel",)),
    )(x.astype(jnp.float32), w.astype(jnp.float32), b2)
    return out[:M]


# ------------- fused FC stack: encoder heads + reparametrize + decoder fc1/fc2 -------------

def _fc_stack_kernel(feat_ref, eps_ref,
                     w11_ref, b11_ref, w12_ref, b12_ref,
                     w21_ref, b21_ref, w22_ref, b22_ref,
                     wd1_ref, bd1_ref, wd2_ref, bd2_ref,
                     mu_ref, logvar_ref, h2_ref):
    f32 = jnp.float32
    feat = feat_ref[...]

    # encoder heads
    hm = _leaky_relu(jnp.dot(feat, w11_ref[...], preferred_element_type=f32) + b11_ref[...])
    mu = jnp.dot(hm, w12_ref[...], preferred_element_type=f32) + b12_ref[...]
    hl = _leaky_relu(jnp.dot(feat, w21_ref[...], preferred_element_type=f32) + b21_ref[...])
    logvar = jnp.dot(hl, w22_ref[...], preferred_element_type=f32) + b22_ref[...]

    # reparametrize (n_samples = 1): z = mu + eps * exp(0.5 * logvar)
    z = mu + eps_ref[...] * jnp.exp(0.5 * logvar)

    # decoder fc1 (elu) + fc2 (elu)
    h1 = _elu(jnp.dot(z, wd1_ref[...], preferred_element_type=f32) + bd1_ref[...])
    h2 = _elu(jnp.dot(h1, wd2_ref[...], preferred_element_type=f32) + bd2_ref[...])

    mu_ref[...] = mu
    logvar_ref[...] = logvar
    h2_ref[...] = h2


def fc_stack(feat, eps, p):
    B, L = eps.shape
    Fin = feat.shape[1]
    Fout = p["dfc2_w"].shape[1]

    # pad batch to a full sublane group (sliced back below)
    Bp = _round_up(max(B, 8), 8)
    featp = jnp.zeros((Bp, Fin), jnp.float32).at[:B].set(feat)
    epsp = jnp.zeros((Bp, L), jnp.float32).at[:B].set(eps)

    args = (featp, epsp,
            p["fc11_w"], p["fc11_b"], p["fc12_w"], p["fc12_b"],
            p["fc21_w"], p["fc21_b"], p["fc22_w"], p["fc22_b"],
            p["dfc1_w"], p["dfc1_b"], p["dfc2_w"], p["dfc2_b"])
    vmem = pl.BlockSpec(memory_space=pltpu.MemorySpace.VMEM)
    mu, logvar, h2 = pl.pallas_call(
        _fc_stack_kernel,
        out_shape=(jax.ShapeDtypeStruct((Bp, L), jnp.float32),
                   jax.ShapeDtypeStruct((Bp, L), jnp.float32),
                   jax.ShapeDtypeStruct((Bp, Fout), jnp.float32)),
        in_specs=[vmem] * len(args),
        out_specs=(vmem, vmem, vmem),
    )(*args)
    return mu[:B], logvar[:B], h2[:B]


# ----------------------------- layout plumbing (wrapper-side) -----------------------------

def _conv_out_hw(h, w, k=KS, s=STR, p=PAD):
    # dilation = 1 for all convs in the model
    return (h + 2 * p - (k - 1) - 1) // s + 1, (w + 2 * p - (k - 1) - 1) // s + 1


def _patchify(x, pad, k=KS, s=STR):
    """stride==kernel Conv2d -> pad + non-overlapping kxk patch extraction (im2col)."""
    assert k == s
    B, C, H, W = x.shape
    oh = (H + 2 * pad - k) // s + 1
    ow = (W + 2 * pad - k) // s + 1
    xp = jnp.pad(x, ((0, 0), (0, 0), (pad, pad), (pad, pad)))[:, :, :oh * k, :ow * k]
    xp = xp.reshape(B, C, oh, k, ow, k).transpose(0, 2, 4, 1, 3, 5)
    return xp.reshape(B * oh * ow, C * k * k), oh, ow


def _conv_w_as_matmul(w):        # (Cout, Cin, k, k) -> (Cin*k*k, Cout)
    cout = w.shape[0]
    return w.transpose(1, 2, 3, 0).reshape(-1, cout)


def _convt_w_as_matmul(w):       # (Cin, Cout, k, k) -> (Cin, Cout*k*k)
    cin = w.shape[0]
    return w.reshape(cin, -1)


def _depth_to_space_crop(y, B, ih, iw, cout, pad, out_hw, k=KS):
    """Inverse of the ConvTranspose matmul: (B*ih*iw, cout*k*k) -> cropped NCHW image."""
    y = y.reshape(B, ih, iw, cout, k, k).transpose(0, 3, 1, 4, 2, 5)
    y = y.reshape(B, cout, ih * k, iw * k)
    return y[:, :, pad:pad + out_hw[0], pad:pad + out_hw[1]]


# ----------------------------- parameters -----------------------------

def init_vae_conv_params(key, latent_dim, img_shape):
    """Deterministic init (uniform +/- 1/sqrt(fan_in)); linear weights stored (in, out)."""
    C, H, W = img_shape
    oh1, ow1 = _conv_out_hw(H, W)
    oh2, ow2 = _conv_out_hw(oh1, ow1)
    feat_dim = OUT_CHANNELS2 * oh2 * ow2

    def unif(k_, shape, fan_in):
        bnd = 1.0 / np.sqrt(fan_in)
        return jax.random.uniform(k_, shape, jnp.float32, -bnd, bnd)

    keys = iter(jax.random.split(key, 24))
    p = {}
    # encoder convs (PyTorch Conv2d layout (Cout, Cin, k, k))
    p["conv1_w"] = unif(next(keys), (OUT_CHANNELS1, C, KS, KS), C * KS * KS)
    p["conv1_b"] = unif(next(keys), (OUT_CHANNELS1,), C * KS * KS)
    p["conv2_w"] = unif(next(keys), (OUT_CHANNELS2, OUT_CHANNELS1, KS, KS), OUT_CHANNELS1 * KS * KS)
    p["conv2_b"] = unif(next(keys), (OUT_CHANNELS2,), OUT_CHANNELS1 * KS * KS)
    # encoder fc heads
    p["fc11_w"] = unif(next(keys), (feat_dim, OUT_FC_FEATURES), feat_dim)
    p["fc11_b"] = unif(next(keys), (1, OUT_FC_FEATURES), feat_dim)
    p["fc12_w"] = unif(next(keys), (OUT_FC_FEATURES, latent_dim), OUT_FC_FEATURES)
    p["fc12_b"] = unif(next(keys), (1, latent_dim), OUT_FC_FEATURES)
    p["fc21_w"] = unif(next(keys), (feat_dim, OUT_FC_FEATURES), feat_dim)
    p["fc21_b"] = unif(next(keys), (1, OUT_FC_FEATURES), feat_dim)
    p["fc22_w"] = unif(next(keys), (OUT_FC_FEATURES, latent_dim), OUT_FC_FEATURES)
    p["fc22_b"] = unif(next(keys), (1, latent_dim), OUT_FC_FEATURES)
    # decoder fcs
    p["dfc1_w"] = unif(next(keys), (latent_dim, OUT_FC_FEATURES), latent_dim)
    p["dfc1_b"] = unif(next(keys), (1, OUT_FC_FEATURES), latent_dim)
    p["dfc2_w"] = unif(next(keys), (OUT_FC_FEATURES, feat_dim), OUT_FC_FEATURES)
    p["dfc2_b"] = unif(next(keys), (1, feat_dim), OUT_FC_FEATURES)
    # decoder transpose convs (PyTorch ConvTranspose2d layout (Cin, Cout, k, k))
    p["convt1_w"] = unif(next(keys), (OUT_CHANNELS2, OUT_CHANNELS1, KS, KS), OUT_CHANNELS2 * KS * KS)
    p["convt1_b"] = unif(next(keys), (OUT_CHANNELS1,), OUT_CHANNELS2 * KS * KS)
    p["convt2_w"] = unif(next(keys), (OUT_CHANNELS1, C, KS, KS), OUT_CHANNELS1 * KS * KS)
    p["convt2_b"] = unif(next(keys), (C,), OUT_CHANNELS1 * KS * KS)
    return p


# ----------------------------- VaeConv forward (Pallas) -----------------------------

def vae_conv_forward_pallas(x, eps, params, *, latent_dim, img_shape, with_sigmoid=True):
    """Returns (recon_x, muz, logvarz), matching VaeConv.forward (riem_log_exp=False)."""
    C, H, W = img_shape
    B = x.shape[0]
    assert x.shape[1] == C * H * W
    assert eps.shape == (B, latent_dim)
    x_img = x.reshape(B, C, H, W)

    # ---- encoder convs (stride==kernel: patchify + fused matmul/leaky-relu) ----
    X1, oh1, ow1 = _patchify(x_img, PAD)
    h1 = linear_act(X1, _conv_w_as_matmul(params["conv1_w"]), params["conv1_b"], "leaky")
    h1_img = h1.reshape(B, oh1, ow1, OUT_CHANNELS1).transpose(0, 3, 1, 2)

    X2, oh2, ow2 = _patchify(h1_img, PAD)
    h2 = linear_act(X2, _conv_w_as_matmul(params["conv2_w"]), params["conv2_b"], "leaky")
    feat = h2.reshape(B, oh2, ow2, OUT_CHANNELS2).transpose(0, 3, 1, 2).reshape(B, -1)

    # ---- fused: encoder fc heads + reparametrize + decoder fc1/fc2 (one kernel) ----
    muz, logvarz, hdec = fc_stack(feat, eps, params)

    # ---- decoder transpose convs (fused matmul/activation + depth-to-space + crop) ----
    ih1, iw1 = oh2, ow2          # decoder in_shape1 spatial
    ih2, iw2 = oh1, ow1          # decoder in_shape2 spatial (output_size of convt1)
    xdec = hdec.reshape(B, OUT_CHANNELS2, ih1, iw1)

    Xd1 = xdec.transpose(0, 2, 3, 1).reshape(B * ih1 * iw1, OUT_CHANNELS2)
    bt1 = jnp.repeat(params["convt1_b"], KS * KS)
    y1 = linear_act(Xd1, _convt_w_as_matmul(params["convt1_w"]), bt1, "leaky")
    img1 = _depth_to_space_crop(y1, B, ih1, iw1, OUT_CHANNELS1, PAD, (ih2, iw2))

    Xd2 = img1.transpose(0, 2, 3, 1).reshape(B * ih2 * iw2, OUT_CHANNELS1)
    bt2 = jnp.repeat(params["convt2_b"], KS * KS)
    y2 = linear_act(Xd2, _convt_w_as_matmul(params["convt2_w"]), bt2,
                    "sigmoid" if with_sigmoid else "none")
    img2 = _depth_to_space_crop(y2, B, ih2, iw2, C, PAD, (H, W))

    recon_x = img2.reshape(B, -1)
    return recon_x, muz, logvarz


# ----------------------------- pure-JAX reference -----------------------------

def _mm(a, b):
    return jnp.matmul(a, b, precision=lax.Precision.HIGHEST)


def _conv2d_ref(x, w, b, stride, pad):
    y = lax.conv_general_dilated(x, w, (stride, stride), [(pad, pad), (pad, pad)],
                                 dimension_numbers=("NCHW", "OIHW", "NCHW"),
                                 precision=lax.Precision.HIGHEST)
    return y + b.reshape(1, -1, 1, 1)


def _conv_transpose2d_ref(x, w, b, stride, pad, out_hw):
    # x: (B, Cin, H, W); w: (Cin, Cout, k, k)  -- PyTorch ConvTranspose2d semantics with
    # output_size = out_hw (output_padding resolved implicitly by the crop).
    Bn, Cin, H, W = x.shape
    k = w.shape[-1]
    xd = jnp.zeros((Bn, Cin, (H - 1) * stride + 1, (W - 1) * stride + 1), x.dtype)
    xd = xd.at[:, :, ::stride, ::stride].set(x)
    wf = w[:, :, ::-1, ::-1].transpose(1, 0, 2, 3)
    y = lax.conv_general_dilated(xd, wf, (1, 1), [(k - 1, k - 1), (k - 1, k - 1)],
                                 dimension_numbers=("NCHW", "OIHW", "NCHW"),
                                 precision=lax.Precision.HIGHEST)
    y = y[:, :, pad:pad + out_hw[0], pad:pad + out_hw[1]]
    return y + b.reshape(1, -1, 1, 1)


def vae_conv_forward_ref(x, eps, params, *, latent_dim, img_shape, with_sigmoid=True):
    C, H, W = img_shape
    B = x.shape[0]
    x_img = x.reshape(B, C, H, W)
    leaky = lambda y: jnp.where(y >= 0, y, NEG_SLOPE * y)
    elu = lambda y: jnp.where(y > 0, y, jnp.exp(jnp.minimum(y, 0.0)) - 1.0)

    h = leaky(_conv2d_ref(x_img, params["conv1_w"], params["conv1_b"], STR, PAD))
    h = leaky(_conv2d_ref(h, params["conv2_w"], params["conv2_b"], STR, PAD))
    feat = h.reshape(B, -1)

    hm = leaky(_mm(feat, params["fc11_w"]) + params["fc11_b"])
    mu = _mm(hm, params["fc12_w"]) + params["fc12_b"]
    hl = leaky(_mm(feat, params["fc21_w"]) + params["fc21_b"])
    logvar = _mm(hl, params["fc22_w"]) + params["fc22_b"]

    z = mu + eps * jnp.exp(0.5 * logvar)

    h1 = elu(_mm(z, params["dfc1_w"]) + params["dfc1_b"])
    h2 = elu(_mm(h1, params["dfc2_w"]) + params["dfc2_b"])

    oh1, ow1 = _conv_out_hw(H, W)
    oh2, ow2 = _conv_out_hw(oh1, ow1)
    xdec = h2.reshape(B, OUT_CHANNELS2, oh2, ow2)
    y = leaky(_conv_transpose2d_ref(xdec, params["convt1_w"], params["convt1_b"],
                                    STR, PAD, (oh1, ow1)))
    y = _conv_transpose2d_ref(y, params["convt2_w"], params["convt2_b"], STR, PAD, (H, W))
    if with_sigmoid:
        y = jax.nn.sigmoid(y)
    return y.reshape(B, -1), mu, logvar


# ----------------------------- demo / self-test -----------------------------

if __name__ == "__main__":
    latent_dim = 8
    img_shape = (1, 28, 28)     # (C, H, W) -- MNIST-like, matches the module's design
    with_sigmoid = True
    batch = 2

    key = jax.random.PRNGKey(0)
    kx, keps, kp = jax.random.split(key, 3)
    x = jax.random.uniform(kx, (batch, int(np.prod(img_shape))), jnp.float32)
    eps = jax.random.normal(keps, (batch, latent_dim), jnp.float32)   # reparametrize noise
    params = init_vae_conv_params(kp, latent_dim, img_shape)

    recon_x, muz, logvarz = vae_conv_forward_pallas(
        x, eps, params, latent_dim=latent_dim, img_shape=img_shape, with_sigmoid=with_sigmoid)
    jax.block_until_ready((recon_x, muz, logvarz))

    r_ref, mu_ref, lv_ref = vae_conv_forward_ref(
        x, eps, params, latent_dim=latent_dim, img_shape=img_shape, with_sigmoid=with_sigmoid)
    np.testing.assert_allclose(np.asarray(muz), np.asarray(mu_ref), rtol=1e-3, atol=1e-3)
    np.testing.assert_allclose(np.asarray(logvarz), np.asarray(lv_ref), rtol=1e-3, atol=1e-3)
    np.testing.assert_allclose(np.asarray(recon_x), np.asarray(r_ref), rtol=1e-3, atol=1e-3)

    print("KERNEL_OK")
</pallas_src>

<mosaic_0001>
module attributes {stable_mosaic.version = 11 : i64} {
  func.func @_linear_act_kernel(%arg0: i32, %arg1: memref<200x16xf32, #tpu.memory_space<vmem>>, %arg2: memref<16x32xf32, #tpu.memory_space<vmem>>, %arg3: memref<1x32xf32, #tpu.memory_space<vmem>>, %arg4: memref<200x32xf32, #tpu.memory_space<vmem>>) attributes {dimension_semantics = [#tpu.dimension_semantics<parallel>], iteration_bounds = array<i64: 1>, scalar_prefetch = 0 : i64, scratch_operands = 0 : i64, tpu.core_type = #tpu.core_type<tc>, window_params = [{transform_indices = @transform_0, window_bounds = array<i64: 200, 16>}, {pipeline_mode = #tpu.pipeline_mode<synchronous>, transform_indices = @transform_1, window_bounds = array<i64: 16, 32>}, {pipeline_mode = #tpu.pipeline_mode<synchronous>, transform_indices = @transform_2, window_bounds = array<i64: 1, 32>}, {transform_indices = @transform_3, window_bounds = array<i64: 200, 32>}]} {
    %c0 = arith.constant 0 : index
    %c0_0 = arith.constant 0 : index
    %0 = vector.load %arg1[%c0, %c0_0] : memref<200x16xf32, #tpu.memory_space<vmem>>, vector<200x16xf32>
    %c0_1 = arith.constant 0 : index
    %c0_2 = arith.constant 0 : index
    %1 = vector.load %arg2[%c0_1, %c0_2] : memref<16x32xf32, #tpu.memory_space<vmem>>, vector<16x32xf32>
    %cst = arith.constant dense<0.000000e+00> : vector<200x32xf32>
    %2 = tpu.matmul %0, %1, %cst {dimension_numbers = #tpu.dot_dimension_numbers<[1], [0], [0], [1], [0, 0, 1, 1], [], []>} : vector<200x16xf32>, vector<16x32xf32>, vector<200x32xf32> -> vector<200x32xf32>
    %c0_3 = arith.constant 0 : index
    %c0_4 = arith.constant 0 : index
    %3 = vector.load %arg3[%c0_3, %c0_4] : memref<1x32xf32, #tpu.memory_space<vmem>>, vector<1x32xf32>
    %4 = vector.broadcast %3 : vector<1x32xf32> to vector<200x32xf32>
    %5 = arith.addf %2, %4 : vector<200x32xf32>
    %cst_5 = arith.constant 0.000000e+00 : f32
    %6 = vector.broadcast %cst_5 : f32 to vector<200x32xf32>
    %7 = arith.cmpf oge, %5, %6 : vector<200x32xf32>
    %cst_6 = arith.constant 2.000000e-01 : f32
    %8 = vector.broadcast %cst_6 : f32 to vector<200x32xf32>
    %9 = arith.mulf %8, %5 : vector<200x32xf32>
    %10 = arith.select %7, %5, %9 : vector<200x32xi1>, vector<200x32xf32>
    %c0_7 = arith.constant 0 : index
    %c0_8 = arith.constant 0 : index
    %11 = vector.load %arg4[%c0_7, %c0_8] : memref<200x32xf32, #tpu.memory_space<vmem>>, vector<200x32xf32>
    tpu.vector_store %arg4[%c0_7, %c0_8], %10 {strides = array<i32>} : memref<200x32xf32, #tpu.memory_space<vmem>>, vector<200x32xf32>,
    return
  }
  func.func @transform_0(%arg0: i32) -> (i32, i32) {
    %c0_i32 = arith.constant 0 : i32
    %c0_i32_0 = arith.constant 0 : i32
    return %arg0, %c0_i32 : i32, i32
  }
  func.func @transform_1(%arg0: i32) -> (i32, i32) {
    %c0_i32 = arith.constant 0 : i32
    %c0_i32_0 = arith.constant 0 : i32
    %c0_i32_1 = arith.constant 0 : i32
    return %c0_i32, %c0_i32_0 : i32, i32
  }
  func.func @transform_2(%arg0: i32) -> (i32, i32) {
    %c0_i32 = arith.constant 0 : i32
    %c0_i32_0 = arith.constant 0 : i32
    %c0_i32_1 = arith.constant 0 : i32
    return %c0_i32, %c0_i32_0 : i32, i32
  }
  func.func @transform_3(%arg0: i32) -> (i32, i32) {
    %c0_i32 = arith.constant 0 : i32
    %c0_i32_0 = arith.constant 0 : i32
    return %arg0, %c0_i32 : i32, i32
  }
}

</mosaic_0001>

<llo_original>
// kernel: tpu_custom_call.1
$region0: #{tpu_custom_call.1}
  #allocation0 [shape = 'u32[]', space=smem, size = 0x4, offset = 0x4, fixed_abs, tag = 'smem constant byte address 0x4 - core index']
  #allocation1 [shape = 'u32[72,128]{1,0:T(1,128)}', space=vmem, size = 0x9000, scoped, tag = 'internal scratch']
  %s0 = inlined_call_operand.vmem [shape: f32[200,16], index: 0, kind: input, shape index: {}]
  %s1 = inlined_call_operand.vmem [shape: f32[16,32], index: 1, kind: input, shape index: {}]
  %s2 = inlined_call_operand.vmem [shape: f32[1,32], index: 2, kind: input, shape index: {}]
  %s3 = inlined_call_operand.vmem [shape: f32[200,32], index: 3, kind: output, shape index: {}]
  %s4 = sld [smem:[#allocation0]]
  $region22: #{tpu_custom_call.1} parent=0
    _
  %s6 = ssub.s32 1, %s4
  %s7 = scalar_select 0, %s6, %s4
  // Predicated region
  $region2: #{tpu_custom_call.1} parent=0 // pred_check
    _
  $region3: #{tpu_custom_call.1} parent=0 // pred_check_branch
    %9 = sbr.rel (0) target = $region5
  $region4: #{tpu_custom_call.1} parent=0 // pred_region
    _
  $region5: #{tpu_custom_call.1} parent=0 // pred_fallthru
    _
  // Predicated region
  $region6: #{tpu_custom_call.1} parent=0 // pred_check
    _
  $region7: #{tpu_custom_call.1} parent=0 // pred_check_branch
    %11 = sbr.rel (0) target = $region9
  $region8: #{tpu_custom_call.1} parent=0 // pred_region
    _
  $region9: #{tpu_custom_call.1} parent=0 // pred_fallthru
    _
  // Predicated region
  $region10: #{tpu_custom_call.1} parent=0 // pred_check
    _
  $region11: #{tpu_custom_call.1} parent=0 // pred_check_branch
    %13 = sbr.rel (0) target = $region13
  $region12: #{tpu_custom_call.1} parent=0 // pred_region
    _
  $region13: #{tpu_custom_call.1} parent=0 // pred_fallthru
    _
  %v14 = vld [vmem:[%s0] sm:$0xff]
  %v15 = vld [vmem:[%s0 + $0x8] sm:$0xff]
  %v16 = vld [vmem:[%s0 + $0x10] sm:$0xff]
  %v17 = vld [vmem:[%s0 + $0x18] sm:$0xff]
  %v18 = vld [vmem:[%s0 + $0x20] sm:$0xff]
  %v19 = vld [vmem:[%s0 + $0x28] sm:$0xff]
  %v20 = vld [vmem:[%s0 + $0x30] sm:$0xff]
  %v21 = vld [vmem:[%s0 + $0x38] sm:$0xff]
  %v22 = vld [vmem:[%s0 + $0x40] sm:$0xff]
  %v23 = vld [vmem:[%s0 + $0x48] sm:$0xff]
  %v24 = vld [vmem:[%s0 + $0x50] sm:$0xff]
  %v25 = vld [vmem:[%s0 + $0x58] sm:$0xff]
  %v26 = vld [vmem:[%s0 + $0x60] sm:$0xff]
  %v27 = vld [vmem:[%s0 + $0x68] sm:$0xff]
  %v28 = vld [vmem:[%s0 + $0x70] sm:$0xff]
  %v29 = vld [vmem:[%s0 + $0x78] sm:$0xff]
  %v30 = vld [vmem:[%s0 + $0x80] sm:$0xff]
  %v31 = vld [vmem:[%s0 + $0x88] sm:$0xff]
  %v32 = vld [vmem:[%s0 + $0x90] sm:$0xff]
  %v33 = vld [vmem:[%s0 + $0x98] sm:$0xff]
  %v34 = vld [vmem:[%s0 + $0xa0] sm:$0xff]
  %v35 = vld [vmem:[%s0 + $0xa8] sm:$0xff]
  %v36 = vld [vmem:[%s0 + $0xb0] sm:$0xff]
  %v37 = vld [vmem:[%s0 + $0xb8] sm:$0xff]
  %v38 = vld [vmem:[%s0 + $0xc0] sm:$0xff]
  %v39 = vld [vmem:[%s1] sm:$0xff]
  %v40 = vld [vmem:[%s1 + $0x8] sm:$0xff]
  %v41 = vld [vmem:[%s2] sm:$0x1]
  %v43 = vperm.slane %v41, 0
  %vm45 = vcmask 130048
  %v47 = vsel %vm45, %v14, 0
  %v50 = vsel %vm45, %v15, 0
  %v53 = vsel %vm45, %v16, 0
  %v56 = vsel %vm45, %v17, 0
  %v59 = vsel %vm45, %v18, 0
  %v62 = vsel %vm45, %v19, 0
  %v65 = vsel %vm45, %v20, 0
  %v68 = vsel %vm45, %v21, 0
  %v71 = vsel %vm45, %v22, 0
  %v74 = vsel %vm45, %v23, 0
  %v77 = vsel %vm45, %v24, 0
  %v80 = vsel %vm45, %v25, 0
  %v83 = vsel %vm45, %v26, 0
  %v86 = vsel %vm45, %v27, 0
  %v89 = vsel %vm45, %v28, 0
  %v92 = vsel %vm45, %v29, 0
  %v95 = vsel %vm45, %v30, 0
  %v98 = vsel %vm45, %v31, 0
  %v101 = vsel %vm45, %v32, 0
  %v104 = vsel %vm45, %v33, 0
  %v107 = vsel %vm45, %v34, 0
  %v110 = vsel %vm45, %v35, 0
  %v113 = vsel %vm45, %v36, 0
  %v116 = vsel %vm45, %v37, 0
  %v119 = vsel %vm45, %v38, 0
  %121 = vmatpush.msra.mxu0 0.0
  %122 = vmatpush.msra.mxu0 0.0
  %123 = vmatpush.msra.mxu0 0.0
  %124 = vmatpush.msra.mxu0 0.0
  %125 = vmatpush.msra.mxu0 0.0
  %126 = vmatpush.msra.mxu0 0.0
  %127 = vmatpush.msra.mxu0 0.0
  %128 = vmatpush.msra.mxu0 0.0
  %129 = vmatpush.msra.mxu0 0.0
  %130 = vmatpush.msra.mxu0 0.0
  %131 = vmatpush.msra.mxu0 0.0
  %132 = vmatpush.msra.mxu0 0.0
  %133 = vmatpush.msra.mxu0 0.0
  %134 = vmatpush.msra.mxu0 0.0
  %135 = vmatpush.msra.mxu0 %v40
  %136 = vmatpush.msra.mxu0 %v39
  %137 = vmatmul.f32.gmra.mxu0 %v47
  %v138 = vpop.f32.mrf.mxu0
  %v139 = vadd.f32 %v43, %v138
  %140 = vmatmul.f32.gmra.mxu0 %v50
  %v141 = vpop.f32.mrf.mxu0
  %v142 = vadd.f32 %v43, %v141
  %143 = vmatmul.f32.gmra.mxu0 %v53
  %v144 = vpop.f32.mrf.mxu0
  %v145 = vadd.f32 %v43, %v144
  %146 = vmatmul.f32.gmra.mxu0 %v56
  %v147 = vpop.f32.mrf.mxu0
  %v148 = vadd.f32 %v43, %v147
  %149 = vmatmul.f32.gmra.mxu0 %v59
  %v150 = vpop.f32.mrf.mxu0
  %v151 = vadd.f32 %v43, %v150
  %152 = vmatmul.f32.gmra.mxu0 %v62
  %v153 = vpop.f32.mrf.mxu0
  %v154 = vadd.f32 %v43, %v153
  %155 = vmatmul.f32.gmra.mxu0 %v65
  %v156 = vpop.f32.mrf.mxu0
  %v157 = vadd.f32 %v43, %v156
  %158 = vmatmul.f32.gmra.mxu0 %v68
  %v159 = vpop.f32.mrf.mxu0
  %v160 = vadd.f32 %v43, %v159
  %161 = vmatmul.f32.gmra.mxu0 %v71
  %v162 = vpop.f32.mrf.mxu0
  %v163 = vadd.f32 %v43, %v162
  %164 = vmatmul.f32.gmra.mxu0 %v74
  %v165 = vpop.f32.mrf.mxu0
  %v166 = vadd.f32 %v43, %v165
  %167 = vmatmul.f32.gmra.mxu0 %v77
  %v168 = vpop.f32.mrf.mxu0
  %v169 = vadd.f32 %v43, %v168
  %170 = vmatmul.f32.gmra.mxu0 %v80
  %v171 = vpop.f32.mrf.mxu0
  %v172 = vadd.f32 %v43, %v171
  %173 = vmatmul.f32.gmra.mxu0 %v83
  %v174 = vpop.f32.mrf.mxu0
  %v175 = vadd.f32 %v43, %v174
  %176 = vmatmul.f32.gmra.mxu0 %v86
  %v177 = vpop.f32.mrf.mxu0
  %v178 = vadd.f32 %v43, %v177
  %179 = vmatmul.f32.gmra.mxu0 %v89
  %v180 = vpop.f32.mrf.mxu0
  %v181 = vadd.f32 %v43, %v180
  %182 = vmatmul.f32.gmra.mxu0 %v92
  %v183 = vpop.f32.mrf.mxu0
  %v184 = vadd.f32 %v43, %v183
  %185 = vmatmul.f32.gmra.mxu0 %v95
  %v186 = vpop.f32.mrf.mxu0
  %v187 = vadd.f32 %v43, %v186
  %188 = vmatmul.f32.gmra.mxu0 %v98
  %v189 = vpop.f32.mrf.mxu0
  %v190 = vadd.f32 %v43, %v189
  %191 = vmatmul.f32.gmra.mxu0 %v101
  %v192 = vpop.f32.mrf.mxu0
  %v193 = vadd.f32 %v43, %v192
  %194 = vmatmul.f32.gmra.mxu0 %v104
  %v195 = vpop.f32.mrf.mxu0
  %v196 = vadd.f32 %v43, %v195
  %197 = vmatmul.f32.gmra.mxu0 %v107
  %v198 = vpop.f32.mrf.mxu0
  %v199 = vadd.f32 %v43, %v198
  %200 = vmatmul.f32.gmra.mxu0 %v110
  %v201 = vpop.f32.mrf.mxu0
  %v202 = vadd.f32 %v43, %v201
  %203 = vmatmul.f32.gmra.mxu0 %v113
  %v204 = vpop.f32.mrf.mxu0
  %v205 = vadd.f32 %v43, %v204
  %206 = vmatmul.f32.gmra.mxu0 %v116
  %v207 = vpop.f32.mrf.mxu0
  %v208 = vadd.f32 %v43, %v207
  %209 = vmatmul.f32.gmra.mxu0 %v119
  %v210 = vpop.f32.mrf.mxu0
  %v211 = vadd.f32 %v43, %v210
  %212 = vdwg.mxu0
  %vm213 = vcmp.ge.f32.partialorder %v139, 0.0
  %vm214 = vcmp.ge.f32.partialorder %v142, 0.0
  %vm215 = vcmp.ge.f32.partialorder %v145, 0.0
  %vm216 = vcmp.ge.f32.partialorder %v148, 0.0
  %vm217 = vcmp.ge.f32.partialorder %v151, 0.0
  %vm218 = vcmp.ge.f32.partialorder %v154, 0.0
  %vm219 = vcmp.ge.f32.partialorder %v157, 0.0
  %vm220 = vcmp.ge.f32.partialorder %v160, 0.0
  %vm221 = vcmp.ge.f32.partialorder %v163, 0.0
  %vm222 = vcmp.ge.f32.partialorder %v166, 0.0
  %vm223 = vcmp.ge.f32.partialorder %v169, 0.0
  %vm224 = vcmp.ge.f32.partialorder %v172, 0.0
  %vm225 = vcmp.ge.f32.partialorder %v175, 0.0
  %vm226 = vcmp.ge.f32.partialorder %v178, 0.0
  %vm227 = vcmp.ge.f32.partialorder %v181, 0.0
  %vm228 = vcmp.ge.f32.partialorder %v184, 0.0
  %vm229 = vcmp.ge.f32.partialorder %v187, 0.0
  %vm230 = vcmp.ge.f32.partialorder %v190, 0.0
  %vm231 = vcmp.ge.f32.partialorder %v193, 0.0
  %vm232 = vcmp.ge.f32.partialorder %v196, 0.0
  %vm233 = vcmp.ge.f32.partialorder %v199, 0.0
  %vm234 = vcmp.ge.f32.partialorder %v202, 0.0
  %vm235 = vcmp.ge.f32.partialorder %v205, 0.0
  %vm236 = vcmp.ge.f32.partialorder %v208, 0.0
  %vm237 = vcmp.ge.f32.partialorder %v211, 0.0
  %v238 = vmul.f32 %v139, 0.2
  %v239 = vmul.f32 %v142, 0.2
  %v240 = vmul.f32 %v145, 0.2
  %v241 = vmul.f32 %v148, 0.2
  %v242 = vmul.f32 %v151, 0.2
  %v243 = vmul.f32 %v154, 0.2
  %v244 = vmul.f32 %v157, 0.2
  %v245 = vmul.f32 %v160, 0.2
  %v246 = vmul.f32 %v163, 0.2
  %v247 = vmul.f32 %v166, 0.2
  %v248 = vmul.f32 %v169, 0.2
  %v249 = vmul.f32 %v172, 0.2
  %v250 = vmul.f32 %v175, 0.2
  %v251 = vmul.f32 %v178, 0.2
  %v252 = vmul.f32 %v181, 0.2
  %v253 = vmul.f32 %v184, 0.2
  %v254 = vmul.f32 %v187, 0.2
  %v255 = vmul.f32 %v190, 0.2
  %v256 = vmul.f32 %v193, 0.2
  %v257 = vmul.f32 %v196, 0.2
  %v258 = vmul.f32 %v199, 0.2
  %v259 = vmul.f32 %v202, 0.2
  %v260 = vmul.f32 %v205, 0.2
  %v261 = vmul.f32 %v208, 0.2
  %v262 = vmul.f32 %v211, 0.2
  %v263 = vsel %vm213, %v139, %v238
  %v264 = vsel %vm214, %v142, %v239
  %v265 = vsel %vm215, %v145, %v240
  %v266 = vsel %vm216, %v148, %v241
  %v267 = vsel %vm217, %v151, %v242
  %v268 = vsel %vm218, %v154, %v243
  %v269 = vsel %vm219, %v157, %v244
  %v270 = vsel %vm220, %v160, %v245
  %v271 = vsel %vm221, %v163, %v246
  %v272 = vsel %vm222, %v166, %v247
  %v273 = vsel %vm223, %v169, %v248
  %v274 = vsel %vm224, %v172, %v249
  %v275 = vsel %vm225, %v175, %v250
  %v276 = vsel %vm226, %v178, %v251
  %v277 = vsel %vm227, %v181, %v252
  %v278 = vsel %vm228, %v184, %v253
  %v279 = vsel %vm229, %v187, %v254
  %v280 = vsel %vm230, %v190, %v255
  %v281 = vsel %vm231, %v193, %v256
  %v282 = vsel %vm232, %v196, %v257
  %v283 = vsel %vm233, %v199, %v258
  %v284 = vsel %vm234, %v202, %v259
  %v285 = vsel %vm235, %v205, %v260
  %v286 = vsel %vm236, %v208, %v261
  %v287 = vsel %vm237, %v211, %v262
  %vm288 = vcmask 261120
  %289 = vst.msk [vmem:[%s3] sm:$0xff] %vm288, %v263
  %290 = vst.msk [vmem:[%s3 + $0x8] sm:$0xff] %vm288, %v264
  %291 = vst.msk [vmem:[%s3 + $0x10] sm:$0xff] %vm288, %v265
  %292 = vst.msk [vmem:[%s3 + $0x18] sm:$0xff] %vm288, %v266
  %293 = vst.msk [vmem:[%s3 + $0x20] sm:$0xff] %vm288, %v267
  %294 = vst.msk [vmem:[%s3 + $0x28] sm:$0xff] %vm288, %v268
  %295 = vst.msk [vmem:[%s3 + $0x30] sm:$0xff] %vm288, %v269
  %296 = vst.msk [vmem:[%s3 + $0x38] sm:$0xff] %vm288, %v270
  %297 = vst.msk [vmem:[%s3 + $0x40] sm:$0xff] %vm288, %v271
  %298 = vst.msk [vmem:[%s3 + $0x48] sm:$0xff] %vm288, %v272
  %299 = vst.msk [vmem:[%s3 + $0x50] sm:$0xff] %vm288, %v273
  %300 = vst.msk [vmem:[%s3 + $0x58] sm:$0xff] %vm288, %v274
  %301 = vst.msk [vmem:[%s3 + $0x60] sm:$0xff] %vm288, %v275
  %302 = vst.msk [vmem:[%s3 + $0x68] sm:$0xff] %vm288, %v276
  %303 = vst.msk [vmem:[%s3 + $0x70] sm:$0xff] %vm288, %v277
  %304 = vst.msk [vmem:[%s3 + $0x78] sm:$0xff] %vm288, %v278
  %305 = vst.msk [vmem:[%s3 + $0x80] sm:$0xff] %vm288, %v279
  %306 = vst.msk [vmem:[%s3 + $0x88] sm:$0xff] %vm288, %v280
  %307 = vst.msk [vmem:[%s3 + $0x90] sm:$0xff] %vm288, %v281
  %308 = vst.msk [vmem:[%s3 + $0x98] sm:$0xff] %vm288, %v282
  %309 = vst.msk [vmem:[%s3 + $0xa0] sm:$0xff] %vm288, %v283
  %310 = vst.msk [vmem:[%s3 + $0xa8] sm:$0xff] %vm288, %v284
  %311 = vst.msk [vmem:[%s3 + $0xb0] sm:$0xff] %vm288, %v285
  %312 = vst.msk [vmem:[%s3 + $0xb8] sm:$0xff] %vm288, %v286
  %313 = vst.msk [vmem:[%s3 + $0xc0] sm:$0xff] %vm288, %v287
  // Predicated region
  $region14: #{tpu_custom_call.1} parent=0 // pred_check
    _
  $region15: #{tpu_custom_call.1} parent=0 // pred_check_branch
    %315 = sbr.rel (0) target = $region17
  $region16: #{tpu_custom_call.1} parent=0 // pred_region
    _
  $region17: #{tpu_custom_call.1} parent=0 // pred_fallthru
    _
  // Predicated region
  $region18: #{tpu_custom_call.1} parent=0 // pred_check
    _
  $region19: #{tpu_custom_call.1} parent=0 // pred_check_branch
    %317 = sbr.rel (0) target = $region21
  $region20: #{tpu_custom_call.1} parent=0 // pred_region
    _
  $region21: #{tpu_custom_call.1} parent=0 // pred_fallthru
    _

</llo_original>
